<compile_context>
chip_gen: v7x
topology: tpu7x:2x2x1
jax: 0.10.0
libtpu: 0.0.40
codegen_flags: <defaults>
</compile_context>

<pallas_src>
import functools
import math

import numpy as np
import jax
import jax.numpy as jnp
from jax import lax
from jax.experimental import pallas as pl
from jax.experimental.pallas import tpu as pltpu


# ----------------------------- module constants ----------------------------

_NUM_BINS = 10          # ConvFlow default num_bins
_TAIL_BOUND = 5.0       # ConvFlow default tail_bound
_MIN_BIN_WIDTH = 1e-3
_MIN_BIN_HEIGHT = 1e-3
_MIN_DERIVATIVE = 1e-3
_DDS_LAYERS = 3         # DDSConv n_layers (fixed to 3 in the module)
_USED_FLOWS = 3         # reverse path applies ConvFlows #4,#3,#2 (first one dropped)

_PARAM_KEYS = (
    "pre_w", "pre_b",
    "dds_sep_w", "dds_sep_b", "dds_n1_g", "dds_n1_b",
    "dds_w1", "dds_b1", "dds_n2_g", "dds_n2_b",
    "proj_w", "proj_b",
    "cf_pre_w", "cf_pre_b",
    "cf_sep_w", "cf_sep_b", "cf_n1_g", "cf_n1_b",
    "cf_w1", "cf_b1", "cf_n2_g", "cf_n2_b",
    "cf_pw_w", "cf_pb_w", "cf_pw_h", "cf_pb_h", "cf_pw_d", "cf_pb_d",
    "ea_m", "ea_logs",
)
_BF16_KEYS = frozenset(
    {"pre_w", "dds_w1", "proj_w", "cf_w1", "cf_pw_w", "cf_pw_h", "cf_pw_d"})


# ------------------------ shared math (kernel + reference) -----------------
# Every "container" below is indexed only with static integers / [...] so the
# same code runs on Pallas Refs (inside the kernel) and on plain arrays (in the
# pure-JAX reference).

def _mm(w, h):
    # 1x1 conv == channel matmul on the MXU; bf16 operands, f32 accumulation.
    return jnp.dot(w, h.astype(w.dtype), preferred_element_type=jnp.float32)


def _gelu(x):
    # tanh-approximate GELU (PyTorch F.gelu uses the exact erf form; diff < ~1e-3).
    c = math.sqrt(2.0 / math.pi)
    return 0.5 * x * (1.0 + jnp.tanh(c * (x + 0.044715 * x * x * x)))


def _layer_norm_channels(x, gamma, beta, eps=1e-5):
    # LayerNorm over the channel axis (axis 0 of a (C, T) slab), per time step.
    mean = jnp.mean(x, axis=0, keepdims=True)
    xc = x - mean
    var = jnp.mean(xc * xc, axis=0, keepdims=True)
    y = xc * lax.rsqrt(var + eps)
    return y * gamma.astype(jnp.float32) + beta.astype(jnp.float32)


def _depthwise_dilated_conv(xm, taps, bias, dilation, roll_fn):
    # xm: (C, T), already masked.  taps: list of K (C, 1) per-channel weights.
    # y[c, t] = sum_j taps[j][c] * xm[c, t + j*d - pad]  (zero outside [0, T)).
    ksize = len(taps)
    t_len = xm.shape[-1]
    pad = (ksize * dilation - dilation) // 2
    lane = lax.broadcasted_iota(jnp.int32, (1, t_len), 1)
    acc = jnp.zeros_like(xm)
    for j in range(ksize):
        off = j * dilation - pad
        if off == 0:
            tap = xm
        else:
            rolled = roll_fn(xm, -off)         # rolled[t] == xm[(t + off) % T]
            valid = jnp.logical_and(lane >= -off, lane <= t_len - 1 - off)
            tap = jnp.where(valid, rolled, 0.0)
        acc = acc + taps[j].astype(jnp.float32) * tap
    return acc + bias.astype(jnp.float32)


def _dds_stack(x, mask, sep_w, sep_b, n1_g, n1_b, w1, b1, n2_g, n2_b, *,
               ksize, n_layers, roll_fn, prefix_idx=(), g=None):
    # DDSConv: dilated depth-separable conv stack with LayerNorm + GELU.
    if g is not None:
        x = x + g
    for i in range(n_layers):
        idx = prefix_idx + (i,)
        dilation = ksize ** i
        taps = [sep_w[idx + (j,)] for j in range(ksize)]
        y = _depthwise_dilated_conv(x * mask, taps, sep_b[idx], dilation, roll_fn)
        y = _layer_norm_channels(y, n1_g[idx], n1_b[idx])
        y = _gelu(y)
        y = _mm(w1[idx], y) + b1[idx].astype(jnp.float32)
        y = _layer_norm_channels(y, n2_g[idx], n2_b[idx])
        y = _gelu(y)
        # TODO(synk): dropout (p_dropout > 0) is the identity at inference time.
        x = x + y
    return x * mask


def _rq_spline_inverse(inputs, w_un, h_un, d_un, *, num_bins, tail_bound):
    # Inverse piecewise rational-quadratic spline with linear tails.
    # inputs: (1, T); w_un/h_un: (nb, T) (already / sqrt(filter_channels));
    # d_un: (nb-1, T).  Bins live on sublanes, time on lanes.
    nb = num_bins
    t_len = inputs.shape[-1]
    left = bottom = -tail_bound
    right = top = tail_bound

    def _bin_fracs(un, mn):
        m = jnp.max(un, axis=0, keepdims=True)
        e = jnp.exp(un - m)
        frac = e / jnp.sum(e, axis=0, keepdims=True)
        return mn + (1.0 - mn * nb) * frac

    widths = _bin_fracs(w_un, _MIN_BIN_WIDTH)      # (nb, T)
    heights = _bin_fracs(h_un, _MIN_BIN_HEIGHT)    # (nb, T)

    # Exclusive prefix sums along the (tiny) bin axis via a triangular matmul.
    row = lax.broadcasted_iota(jnp.int32, (nb, nb), 0)
    col = lax.broadcasted_iota(jnp.int32, (nb, nb), 1)
    tri_excl = (row > col).astype(jnp.float32)
    cw_excl = jnp.dot(tri_excl, widths, preferred_element_type=jnp.float32)
    ch_excl = jnp.dot(tri_excl, heights, preferred_element_type=jnp.float32)

    bin_row = lax.broadcasted_iota(jnp.int32, (nb, t_len), 0)
    is_last = bin_row == (nb - 1)
    cw_lo = left + (right - left) * cw_excl
    cw_hi = jnp.where(is_last, right, left + (right - left) * (cw_excl + widths))
    ch_lo = bottom + (top - bottom) * ch_excl
    ch_hi = jnp.where(is_last, top, bottom + (top - bottom) * (ch_excl + heights))
    bin_w = cw_hi - cw_lo
    bin_h = ch_hi - ch_lo

    # Knot derivatives: interior via softplus, boundaries fixed to 1 (linear tails).
    d_edge = _MIN_DERIVATIVE + math.log1p(
        math.exp(math.log(math.exp(1.0 - _MIN_DERIVATIVE) - 1.0)))
    d_inner = _MIN_DERIVATIVE + jnp.log(1.0 + jnp.exp(d_un))     # (nb-1, T)

    # searchsorted over the y-knots (inverse transform); top knot bumped by eps.
    ge_lo = jnp.sum((inputs >= ch_lo).astype(jnp.float32), axis=0, keepdims=True)
    ge_top = (inputs >= (top + 1e-6)).astype(jnp.float32)
    bin_idx_f = jnp.clip(ge_lo + ge_top - 1.0, 0.0, float(nb - 1))
    bin_idx = bin_idx_f.astype(jnp.int32)                        # (1, T)

    onehot = (bin_row == bin_idx).astype(jnp.float32)            # (nb, T)

    def _sel(q):
        return jnp.sum(onehot * q, axis=0, keepdims=True)

    in_cw = _sel(cw_lo)
    in_bw = _sel(bin_w)
    in_ch = _sel(ch_lo)
    in_h = _sel(bin_h)
    in_delta = _sel(bin_h / bin_w)

    inner_row = lax.broadcasted_iota(jnp.int32, (nb - 1, t_len), 0)
    sel_lo = jnp.sum((inner_row == (bin_idx - 1)).astype(jnp.float32) * d_inner,
                     axis=0, keepdims=True)
    sel_hi = jnp.sum((inner_row == bin_idx).astype(jnp.float32) * d_inner,
                     axis=0, keepdims=True)
    in_d = jnp.where(bin_idx == 0, d_edge, sel_lo)
    in_dp1 = jnp.where(bin_idx == (nb - 1), d_edge, sel_hi)

    dd = in_d + in_dp1 - 2.0 * in_delta
    diff = inputs - in_ch
    qa = diff * dd + in_h * (in_delta - in_d)
    qb = in_h * in_d - diff * dd
    qc = -in_delta * diff
    disc = jnp.maximum(qb * qb - 4.0 * qa * qc, 0.0)   # >= 0 analytically
    root = (2.0 * qc) / (-qb - jnp.sqrt(disc))
    out_inside = root * in_bw + in_cw

    inside = jnp.logical_and(inputs >= -tail_bound, inputs <= tail_bound)
    return jnp.where(inside, out_inside, inputs)


def _conv_flow_reverse(z0, z1, mask, g, P, f, *, C, ksize, n_dds_layers,
                       num_bins, tail_bound, roll_fn):
    # ConvFlow(2, C, k, n_layers=3) in reverse mode; half_channels == 1.
    h = P["cf_pre_w"][f].astype(jnp.float32) * z0 + P["cf_pre_b"][f].astype(jnp.float32)
    h = _dds_stack(h, mask,
                   P["cf_sep_w"], P["cf_sep_b"], P["cf_n1_g"], P["cf_n1_b"],
                   P["cf_w1"], P["cf_b1"], P["cf_n2_g"], P["cf_n2_b"],
                   ksize=ksize, n_layers=n_dds_layers, roll_fn=roll_fn,
                   prefix_idx=(f,), g=g)
    inv_sqrt_c = 1.0 / math.sqrt(C)
    w_un = (_mm(P["cf_pw_w"][f], h) + P["cf_pb_w"][f].astype(jnp.float32)) * mask * inv_sqrt_c
    h_un = (_mm(P["cf_pw_h"][f], h) + P["cf_pb_h"][f].astype(jnp.float32)) * mask * inv_sqrt_c
    d_un = (_mm(P["cf_pw_d"][f], h) + P["cf_pb_d"][f].astype(jnp.float32)) * mask
    z1_new = _rq_spline_inverse(z1, w_un, h_un, d_un,
                                num_bins=num_bins, tail_bound=tail_bound)
    return z1_new * mask


def _sdp_reverse_single(x, mask, n0, n1, P, *, roll_fn, C, ksize, n_dds_layers,
                        n_used_flows, num_bins, tail_bound, noise_scale):
    x = x.astype(jnp.float32)
    mask = mask.astype(jnp.float32)
    z0 = n0.astype(jnp.float32) * noise_scale
    z1 = n1.astype(jnp.float32) * noise_scale

    # Conditioning stack: x = proj(DDSConv(pre(x), mask)) * mask
    h = _mm(P["pre_w"][...], x) + P["pre_b"][...].astype(jnp.float32)
    # TODO(synk): g-conditioning (gin_channels > 0, self.cond) not implemented.
    h = _dds_stack(h, mask,
                   P["dds_sep_w"], P["dds_sep_b"], P["dds_n1_g"], P["dds_n1_b"],
                   P["dds_w1"], P["dds_b1"], P["dds_n2_g"], P["dds_n2_b"],
                   ksize=ksize, n_layers=n_dds_layers, roll_fn=roll_fn)
    g_cond = (_mm(P["proj_w"][...], h) + P["proj_b"][...].astype(jnp.float32)) * mask

    # Reversed flow stack (first ConvFlow dropped, as in the module):
    #   Flip, CF_n, Flip, CF_{n-1}, ..., Flip, CF_2, Flip, ElementwiseAffine
    for f in range(n_used_flows):
        z0, z1 = z1, z0                                   # Flip == free channel swap
        z1 = _conv_flow_reverse(z0, z1, mask, g_cond, P, f, C=C, ksize=ksize,
                                n_dds_layers=n_dds_layers, num_bins=num_bins,
                                tail_bound=tail_bound, roll_fn=roll_fn)
        z0 = z0 * mask
    z0, z1 = z1, z0                                       # final Flip

    # ElementwiseAffine (reverse); only channel 0 (= logw) is ever used.
    m0 = P["ea_m"][...][0:1].astype(jnp.float32)
    logs0 = P["ea_logs"][...][0:1].astype(jnp.float32)
    return (z0 - m0) * jnp.exp(-logs0) * mask


# ------------------------------- Pallas kernel ------------------------------

@functools.lru_cache(maxsize=None)
def _pltpu_roll_sign():
    """Probe pltpu.roll's rotation convention once: +1 if it matches jnp.roll."""
    def probe(x_ref, o_ref):
        o_ref[...] = pltpu.roll(x_ref[...], 1, 1)

    x = jnp.tile(lax.iota(jnp.float32, 128)[None, :], (8, 1))
    y = pl.pallas_call(probe, out_shape=jax.ShapeDtypeStruct((8, 128), jnp.float32))(x)
    return 1 if bool(jnp.allclose(y, jnp.roll(x, 1, axis=1))) else -1


def _make_kernel_roll(roll_sign):
    def roll_fn(a, shift):
        t_len = a.shape[-1]
        return pltpu.roll(a, (roll_sign * shift) % t_len, 1)
    return roll_fn


def _sdp_reverse_kernel(x_ref, mask_ref, z0_ref, z1_ref, *rest,
                        filter_channels, kernel_size, n_dds_layers, n_used_flows,
                        num_bins, tail_bound, noise_scale, roll_sign):
    n_params = len(_PARAM_KEYS)
    P = dict(zip(_PARAM_KEYS, rest[:n_params]))
    out_ref = rest[n_params]

    logw = _sdp_reverse_single(
        x_ref[0], mask_ref[0], z0_ref[0], z1_ref[0], P,
        roll_fn=_make_kernel_roll(roll_sign),
        C=filter_channels, ksize=kernel_size, n_dds_layers=n_dds_layers,
        n_used_flows=n_used_flows, num_bins=num_bins, tail_bound=tail_bound,
        noise_scale=noise_scale)
    out_ref[0] = logw.astype(out_ref.dtype)


def _estimate_cost(inputs, B, c_in, C, t_pad, K, L, F, NB):
    mm_flops = 2 * t_pad * (C * c_in + (1 + F) * L * C * C + C * C
                            + F * (3 * NB - 1) * C + F * 2 * NB * NB)
    vpu_flops = 2 * t_pad * (1 + F) * L * K * C
    flops = B * (mm_flops + vpu_flops)
    transcendentals = B * t_pad * ((1 + F) * L * 2 * C + F * (3 * NB + 2) + 1)
    in_bytes = sum(int(np.prod(a.shape)) * a.dtype.itemsize for a in inputs)
    return pl.CostEstimate(flops=int(flops), transcendentals=int(transcendentals),
                           bytes_accessed=int(in_bytes + B * t_pad * 4))


def stochastic_duration_predictor_reverse(x, x_mask, noise, params, *,
                                          kernel_size, noise_scale=1.0,
                                          tail_bound=_TAIL_BOUND):
    """Inference (reverse=True) forward pass.  Returns logw of shape (B, 1, T)."""
    B, c_in, t_len = x.shape
    C = params["proj_w"].shape[0]
    L = params["dds_w1"].shape[0]
    F = params["cf_pre_w"].shape[0]
    NB = params["cf_pw_w"].shape[1]

    # Lane-dense layout: pad time up to a multiple of 128.  All time-mixing ops
    # are mask-aware, so the padded tail never leaks into valid positions.
    t_pad = max(128, ((t_len + 127) // 128) * 128)
    if t_pad != t_len:
        padw = ((0, 0), (0, 0), (0, t_pad - t_len))
        x = jnp.pad(x, padw)
        x_mask = jnp.pad(x_mask, padw)
        noise = jnp.pad(noise, padw)
    noise0 = noise[:, 0:1, :]
    noise1 = noise[:, 1:2, :]

    ordered_params = [params[k] for k in _PARAM_KEYS]

    kernel = functools.partial(
        _sdp_reverse_kernel,
        filter_channels=C, kernel_size=kernel_size, n_dds_layers=L,
        n_used_flows=F, num_bins=NB, tail_bound=tail_bound,
        noise_scale=noise_scale, roll_sign=_pltpu_roll_sign())

    def batch_spec(nch):
        return pl.BlockSpec((1, nch, t_pad), lambda b: (b, 0, 0))

    def full_spec(shape):
        return pl.BlockSpec(shape, lambda b, _n=len(shape): (0,) * _n)

    in_specs = ([batch_spec(c_in), batch_spec(1), batch_spec(1), batch_spec(1)]
                + [full_spec(p.shape) for p in ordered_params])

    cost = _estimate_cost([x, x_mask, noise0, noise1] + ordered_params,
                          B, c_in, C, t_pad, kernel_size, L, F, NB)

    out = pl.pallas_call(
        kernel,
        out_shape=jax.ShapeDtypeStruct((B, 1, t_pad), jnp.float32),
        grid_spec=pltpu.PrefetchScalarGridSpec(
            num_scalar_prefetch=0,
            grid=(B,),
            in_specs=in_specs,
            out_specs=pl.BlockSpec((1, 1, t_pad), lambda b: (b, 0, 0)),
        ),
        compiler_params=pltpu.CompilerParams(dimension_semantics=("parallel",)),
        cost_estimate=cost,
    )(x, x_mask, noise0, noise1, *ordered_params)
    return out[:, :, :t_len]


# --------------------------- parameters / reference -------------------------

def init_params(key, *, in_channels, kernel_size, n_dds_layers=_DDS_LAYERS,
                n_used_flows=_USED_FLOWS, num_bins=_NUM_BINS):
    C = in_channels            # the module forces filter_channels = in_channels
    K, L, F, NB = kernel_size, n_dds_layers, n_used_flows, num_bins
    keys = iter(jax.random.split(key, 40))

    def rnd(shape, scale=0.2):
        return scale * jax.random.normal(next(keys), shape, jnp.float32)

    return {
        "pre_w": rnd((C, C)), "pre_b": rnd((C, 1)),
        "dds_sep_w": rnd((L, K, C, 1)), "dds_sep_b": rnd((L, C, 1)),
        "dds_n1_g": 1.0 + rnd((L, C, 1), 0.05), "dds_n1_b": rnd((L, C, 1), 0.05),
        "dds_w1": rnd((L, C, C)), "dds_b1": rnd((L, C, 1)),
        "dds_n2_g": 1.0 + rnd((L, C, 1), 0.05), "dds_n2_b": rnd((L, C, 1), 0.05),
        "proj_w": rnd((C, C)), "proj_b": rnd((C, 1)),
        "cf_pre_w": rnd((F, C, 1)), "cf_pre_b": rnd((F, C, 1)),
        "cf_sep_w": rnd((F, L, K, C, 1)), "cf_sep_b": rnd((F, L, C, 1)),
        "cf_n1_g": 1.0 + rnd((F, L, C, 1), 0.05), "cf_n1_b": rnd((F, L, C, 1), 0.05),
        "cf_w1": rnd((F, L, C, C)), "cf_b1": rnd((F, L, C, 1)),
        "cf_n2_g": 1.0 + rnd((F, L, C, 1), 0.05), "cf_n2_b": rnd((F, L, C, 1), 0.05),
        # NOTE: the PyTorch module zero-initialises ConvFlow.proj; small random
        # weights are used here so the spline math is actually exercised.
        "cf_pw_w": rnd((F, NB, C), 0.3), "cf_pb_w": rnd((F, NB, 1), 0.3),
        "cf_pw_h": rnd((F, NB, C), 0.3), "cf_pb_h": rnd((F, NB, 1), 0.3),
        "cf_pw_d": rnd((F, NB - 1, C), 0.3), "cf_pb_d": rnd((F, NB - 1, 1), 0.3),
        "ea_m": rnd((2, 1)), "ea_logs": rnd((2, 1)),
    }


def cast_matmul_weights(params):
    # bf16 for MXU matmul operands (halves weight HBM/VMEM traffic); f32 elsewhere.
    return {k: (v.astype(jnp.bfloat16) if k in _BF16_KEYS else v)
            for k, v in params.items()}


def stochastic_duration_predictor_reverse_reference(x, x_mask, noise, params, *,
                                                    kernel_size, noise_scale=1.0,
                                                    tail_bound=_TAIL_BOUND):
    """Pure-JAX (vmapped, unpadded) reference of the same forward math."""
    C = params["proj_w"].shape[0]
    L = params["dds_w1"].shape[0]
    F = params["cf_pre_w"].shape[0]
    NB = params["cf_pw_w"].shape[1]
    roll_fn = lambda a, s: jnp.roll(a, s, axis=1)

    def one(xb, mb, n0, n1):
        return _sdp_reverse_single(xb, mb, n0, n1, params, roll_fn=roll_fn,
                                   C=C, ksize=kernel_size, n_dds_layers=L,
                                   n_used_flows=F, num_bins=NB,
                                   tail_bound=tail_bound, noise_scale=noise_scale)

    return jax.vmap(one)(x, x_mask, noise[:, 0:1, :], noise[:, 1:2, :])


# ----------------------------------- main -----------------------------------

if __name__ == "__main__":
    B, in_channels, T = 2, 32, 16
    kernel_size = 3
    noise_scale = 0.8

    key = jax.random.PRNGKey(0)
    k_x, k_n, k_p = jax.random.split(key, 3)
    x = jax.random.normal(k_x, (B, in_channels, T), jnp.float32)
    lengths = np.array([T, 12])
    x_mask = jnp.asarray(
        (np.arange(T)[None, None, :] < lengths[:, None, None]).astype(np.float32))
    # TODO(synk): noise is generated host-side (instead of torch.randn inside
    # forward) so the kernel and reference are deterministic and comparable.
    noise = jax.random.normal(k_n, (B, 2, T), jnp.float32)

    params = cast_matmul_weights(
        init_params(k_p, in_channels=in_channels, kernel_size=kernel_size))

    logw = stochastic_duration_predictor_reverse(
        x, x_mask, noise, params, kernel_size=kernel_size, noise_scale=noise_scale)
    logw = jax.block_until_ready(logw)

    ref = stochastic_duration_predictor_reverse_reference(
        x, x_mask, noise, params, kernel_size=kernel_size, noise_scale=noise_scale)
    ref = jax.block_until_ready(ref)

    assert logw.shape == (B, 1, T), logw.shape
    np.testing.assert_allclose(np.asarray(logw), np.asarray(ref),
                               rtol=5e-3, atol=5e-3)
    print("KERNEL_OK")
</pallas_src>

<mosaic_0001>
module attributes {stable_mosaic.version = 11 : i64} {
  func.func @probe(%arg0: memref<8x128xf32, #tpu.memory_space<vmem>>, %arg1: memref<8x128xf32, #tpu.memory_space<vmem>>) attributes {dimension_semantics = [], scalar_prefetch = 0 : i64, scratch_operands = 0 : i64, tpu.core_type = #tpu.core_type<tc>} {
    %c0 = arith.constant 0 : index
    %c0_0 = arith.constant 0 : index
    %0 = vector.load %arg0[%c0, %c0_0] : memref<8x128xf32, #tpu.memory_space<vmem>>, vector<8x128xf32>
    %c1_i32 = arith.constant 1 : i32
    %1 = tpu.dynamic_rotate %0 by %c1_i32 dim 1 : vector<8x128xf32>, i32 -> vector<8x128xf32>
    %c0_1 = arith.constant 0 : index
    %c0_2 = arith.constant 0 : index
    %2 = vector.load %arg1[%c0_1, %c0_2] : memref<8x128xf32, #tpu.memory_space<vmem>>, vector<8x128xf32>
    tpu.vector_store %arg1[%c0_1, %c0_2], %1 {strides = array<i32>} : memref<8x128xf32, #tpu.memory_space<vmem>>, vector<8x128xf32>,
    return
  }
}

</mosaic_0001>

<llo_original>
// kernel: tpu_custom_call.1
$region0: #{tpu_custom_call.1}
  #allocation0 [shape = 'u32[]', space=smem, size = 0x4, offset = 0x4, fixed_abs, tag = 'smem constant byte address 0x4 - core index']
  #allocation1 [shape = 'u32[144,128]{1,0:T(1,128)}', space=vmem, size = 0x12000, scoped, tag = 'internal scratch']
  %s0 = inlined_call_operand.hbm [shape: f32[8,128], index: 0, kind: input, shape index: {}]
  %s1 = inlined_call_operand.hbm [shape: f32[8,128], index: 1, kind: output, shape index: {}]
  %s2 = sld [smem:[#allocation0]]
  $region18: #{tpu_custom_call.1} parent=0
    _
  %s4 = ssub.s32 1, %s2
  %s5 = scalar_select 0, %s4, %s2
  $region1: #{tpu_custom_call.1} parent=0
    #allocation2 [shape = 'u8[4096]{0}', space=vmem, size = 0x1000, scoped, tag = 'input window, operand 0, single buffered']
    #allocation3 [shape = 's32[1]{0}', space=sflag, size = 0x4, scoped, tag = 'scoped memory for tpu_custom_call.1']
    #allocation4 [shape = 's32[1]{0}', space=sflag, size = 0x4, scoped, tag = 'scoped memory for tpu_custom_call.1']
    #allocation5 [shape = 'u8[4096]{0}', space=vmem, size = 0x1000, scoped, tag = 'output window, operand 0, single buffered']
    %6 = vsyncpa [#allocation3], 0
    %7 = vsyncpa [#allocation4], 0
    // Predicated region
    $region2: #{tpu_custom_call.1} parent=1 // pred_check
      _
    $region3: #{tpu_custom_call.1} parent=1 // pred_check_branch
      %9 = sbr.rel (0) target = $region5
    $region4: #{tpu_custom_call.1} parent=1 // pred_region
      %s11 = ssub.s32 128, 128
      %12 = vsyncadd [#allocation3], %s11
      %s14 = sshll.u32 [#allocation2], 4
      %s15 = int_to_ptr.vmem [resolvable:$true] %s14
      %17 = dma.hbm_to_vmem [thread:$0]  %s0, 128, %s15, [#allocation3]
    $region5: #{tpu_custom_call.1} parent=1 // pred_fallthru
      _
    // Predicated region
    $region6: #{tpu_custom_call.1} parent=1 // pred_check
      _
    $region7: #{tpu_custom_call.1} parent=1 // pred_check_branch
      %19 = sbr.rel (0) target = $region9
    $region8: #{tpu_custom_call.1} parent=1 // pred_region
      %20 = dma.done [#allocation3], 128
    $region9: #{tpu_custom_call.1} parent=1 // pred_fallthru
      _
    %v21 = vld [vmem:[#allocation2] sm:$0xff]
    %22 = vrot.lane.b32.xlu0 %v21, 1
    %v23 = vpop.permute.xlu0 %22
    %24 = vst [vmem:[#allocation5] sm:$0xff] %v23
    // Predicated region
    $region10: #{tpu_custom_call.1} parent=1 // pred_check
      _
    $region11: #{tpu_custom_call.1} parent=1 // pred_check_branch
      %26 = sbr.rel (0) target = $region13
    $region12: #{tpu_custom_call.1} parent=1 // pred_region
      %s28 = ssub.s32 128, 128
      %29 = vsyncadd [#allocation4], %s28
      %s31 = sshll.u32 [#allocation5], 4
      %s32 = int_to_ptr.vmem [resolvable:$true] %s31
      %34 = dma.vmem_to_hbm [thread:$0]  %s32, 128, %s1, [#allocation4]
    $region13: #{tpu_custom_call.1} parent=1 // pred_fallthru
      _
    // Predicated region
    $region14: #{tpu_custom_call.1} parent=1 // pred_check
      _
    $region15: #{tpu_custom_call.1} parent=1 // pred_check_branch
      %36 = sbr.rel (0) target = $region17
    $region16: #{tpu_custom_call.1} parent=1 // pred_region
      %37 = dma.done [#allocation4], 128
    $region17: #{tpu_custom_call.1} parent=1 // pred_fallthru
      _
    %38 = vsyncpa [#allocation3], 1
    %39 = vsyncpa [#allocation4], 1

</llo_original>
